<compile_context>
chip_gen: v6e
topology: v6e:2x2x1
jax: 0.10.0
libtpu: 0.0.40
codegen_flags: <defaults>
</compile_context>

<pallas_src>
import math
import functools

import jax
import jax.numpy as jnp
from jax.experimental import pallas as pl
from jax.experimental.pallas import tpu as pltpu


def build_pe_table(d_model: int, max_len: int) -> jnp.ndarray:
    """Deterministic sinusoidal positional-encoding table (max_len, d_model)."""
    position = jnp.arange(0, max_len, dtype=jnp.float32)[:, None]            # (L, 1)
    div_term = jnp.exp(
        jnp.arange(0, d_model, 2, dtype=jnp.float32)
        * -(math.log(10000.0) / d_model)
    )                                                                         # (D/2,)
    angles = position * div_term                                              # (L, D/2)
    pe = jnp.zeros((max_len, d_model), dtype=jnp.float32)
    pe = pe.at[:, 0::2].set(jnp.sin(angles))
    pe = pe.at[:, 1::2].set(jnp.cos(angles))
    return pe


# --------------------------- kernel A: x * sqrt(d) ---------------------------

def _scale_kernel(x_ref, o_ref, *, xscale):
    # Pure VPU elementwise on the current tile; HBM traffic is the bottleneck.
    o_ref[...] = x_ref[...] * xscale


def _target_tile_bytes() -> int:
    """~4 MiB tiles on v6e/v7x, ~2 MiB on v5e (16 MiB scoped-VMEM default)."""
    try:
        kind = jax.devices()[0].device_kind.lower()
    except Exception:
        kind = ""
    if ("v5 lite" in kind) or ("v5e" in kind) or ("v5litepod" in kind):
        return 2 * 1024 * 1024
    return 4 * 1024 * 1024


def _pick_row_block(m: int, n: int, itemsize: int, target_bytes: int) -> int:
    """Row block ~target_bytes, multiple of 8; prefers an exact divisor of m."""
    cap = max(8, (target_bytes // max(1, n * itemsize)) // 8 * 8)
    if cap >= m:
        return m                       # full-extent block (always legal)
    # Prefer a divisor of m so the last grid step is a full (unmasked) block.
    lo = max(8, cap // 2)
    for blk in range(cap, lo - 1, -8):
        if m % blk == 0:
            return blk
    return cap                          # ragged tail (masked, still correct)


def _scale_rows(x2: jnp.ndarray, xscale: float, row_block: int,
                *, donate: bool = False) -> jnp.ndarray:
    m, n = x2.shape
    itemsize = x2.dtype.itemsize
    extra = {}
    if donate:
        extra["input_output_aliases"] = {0: 0}
    return pl.pallas_call(
        functools.partial(_scale_kernel, xscale=xscale),
        out_shape=jax.ShapeDtypeStruct((m, n), x2.dtype),
        grid=(pl.cdiv(m, row_block),),
        in_specs=[pl.BlockSpec((row_block, n), lambda i: (i, 0))],
        out_specs=pl.BlockSpec((row_block, n), lambda i: (i, 0)),
        compiler_params=pltpu.CompilerParams(
            dimension_semantics=("parallel",),     # megacore split on v7x
            vmem_limit_bytes=32 * 1024 * 1024,     # headroom for 4 MiB tiles
        ),
        cost_estimate=pl.CostEstimate(
            flops=m * n,
            transcendentals=0,
            bytes_accessed=2 * m * n * itemsize,
        ),
        **extra,
    )(x2)


# ------------------- kernel B: pos_emb = pe[offset:offset+T] ------------------

def _pe_window_kernel(off_ref, pe_hbm, out_hbm, sem):
    # Single direct HBM->HBM DMA of the [offset, offset+T) window of pe into
    # the output buffer.  The dynamic (possibly unaligned) start is handled by
    # the DMA engine; no VMEM staging hop, no per-block latency exposure.
    # TODO(synk): if offset is guaranteed 8-aligned, wrap start in
    # pl.multiple_of(start, 8) for the aligned DMA descriptor path.
    start = off_ref[0]
    t = out_hbm.shape[0]
    cp = pltpu.make_async_copy(pe_hbm.at[pl.ds(start, t), :], out_hbm, sem)
    cp.start()
    cp.wait()


def _pe_window(pe: jnp.ndarray, offset_arr: jnp.ndarray, t: int) -> jnp.ndarray:
    L, D = pe.shape
    itemsize = pe.dtype.itemsize
    return pl.pallas_call(
        _pe_window_kernel,
        out_shape=jax.ShapeDtypeStruct((t, D), pe.dtype),
        grid_spec=pltpu.PrefetchScalarGridSpec(
            num_scalar_prefetch=1,
            grid=(1,),
            in_specs=[pl.BlockSpec(memory_space=pl.ANY)],    # pe stays in HBM
            out_specs=pl.BlockSpec(memory_space=pl.ANY),     # write HBM directly
            scratch_shapes=[pltpu.SemaphoreType.DMA(())],
        ),
        compiler_params=pltpu.CompilerParams(
            dimension_semantics=("arbitrary",),
        ),
        cost_estimate=pl.CostEstimate(
            flops=0,
            transcendentals=0,
            bytes_accessed=2 * t * D * itemsize,
        ),
    )(offset_arr, pe)


# --------------------------------- wrapper -----------------------------------

def rel_positional_encoding(x: jnp.ndarray, pe: jnp.ndarray, offset=0,
                            *, donate_x: bool = False):
    """Pallas forward of RelPositionalEncoding.

    Args:
      x:        (batch, time, d_model) float32
      pe:       (max_len, d_model) float32 sinusoidal table
      offset:   int / scalar start offset into the table (offset + time <= max_len)
      donate_x: set True only if the caller donates x's buffer (adds
                input_output_aliases={0: 0} on the scale kernel).

    Returns:
      (x * sqrt(d_model), pe[None, offset:offset+time])
    """
    B, T, D = x.shape
    L, Dp = pe.shape
    assert D == Dp
    assert T <= L, "time must be <= max_len"
    xscale = math.sqrt(D)

    # ---- x * sqrt(d_model): lane-dense 2-D view, tiled over rows ----
    total = B * T * D
    target_bytes = _target_tile_bytes()
    pad = 0
    if D % 128 == 0:
        x2 = x.reshape(B * T, D)                       # already lane-dense
    elif total % 128 == 0:
        x2 = x.reshape(total // 128, 128)              # fold to lane-dense
    else:
        # Pad the flattened x to a lane-dense multiple of 8*128 so stores are
        # unmasked full-lane vst; slice the padding off afterwards.
        pad = (-total) % (8 * 128)
        x2 = jnp.pad(x.reshape(total), (0, pad)).reshape((total + pad) // 128, 128)

    row_block = _pick_row_block(x2.shape[0], x2.shape[1], x2.dtype.itemsize,
                                target_bytes)
    scaled = _scale_rows(x2, xscale, row_block, donate=donate_x)
    if pad:
        x_out = scaled.reshape(-1)[:total].reshape(B, T, D)
    else:
        x_out = scaled.reshape(B, T, D)

    # ---- pos_emb: one direct HBM->HBM DMA of pe[offset : offset+T] ----
    if isinstance(offset, int):
        # Match the PyTorch module's precondition at trace time.
        assert offset + T <= L, "offset + time must be <= max_len"
        offset_arr = jnp.full((1,), offset, dtype=jnp.int32)
    else:
        # TODO(synk): dynamic (traced) offsets are clamped to a valid window
        # instead of raising like the PyTorch assert would.
        offset_arr = jnp.reshape(jnp.asarray(offset, dtype=jnp.int32), (1,))
        offset_arr = jnp.clip(offset_arr, 0, L - T)

    pos_emb = _pe_window(pe, offset_arr, T)[None]

    # dropout_rate is treated as 0.0 (eval-mode identity); outputs returned as-is.
    return x_out, pos_emb


if __name__ == "__main__":
    # Small shapes consistent with the module: (batch, time, d_model)
    batch, time, d_model, max_len = 2, 8, 32, 64
    offset = 3

    key = jax.random.PRNGKey(0)
    x = jax.random.normal(key, (batch, time, d_model), dtype=jnp.float32)

    pe = build_pe_table(d_model, max_len)

    x_out, pos_emb = rel_positional_encoding(x, pe, offset=offset)
    jax.block_until_ready((x_out, pos_emb))

    # Reference check against plain-JAX semantics of the PyTorch forward.
    x_ref = x * math.sqrt(d_model)
    pe_ref = pe[None, offset:offset + time]
    assert x_out.shape == (batch, time, d_model)
    assert pos_emb.shape == (1, time, d_model)
    assert jnp.allclose(x_out, x_ref, atol=1e-6)
    assert jnp.allclose(pos_emb, pe_ref, atol=1e-6)

    print("KERNEL_OK")
</pallas_src>

<mosaic_0001>
module attributes {stable_mosaic.version = 11 : i64} {
  func.func @_scale_kernel(%arg0: i32, %arg1: memref<4x128xf32, #tpu.memory_space<vmem>>, %arg2: memref<4x128xf32, #tpu.memory_space<vmem>>) attributes {dimension_semantics = [#tpu.dimension_semantics<parallel>], iteration_bounds = array<i64: 1>, scalar_prefetch = 0 : i64, scratch_operands = 0 : i64, tpu.core_type = #tpu.core_type<tc>, window_params = [{transform_indices = @transform_0, window_bounds = array<i64: 4, 128>}, {transform_indices = @transform_1, window_bounds = array<i64: 4, 128>}]} {
    %c0 = arith.constant 0 : index
    %c0_0 = arith.constant 0 : index
    %0 = vector.load %arg1[%c0, %c0_0] : memref<4x128xf32, #tpu.memory_space<vmem>>, vector<4x128xf32>
    %cst = arith.constant 5.65685415 : f32
    %1 = vector.broadcast %cst : f32 to vector<4x128xf32>
    %2 = arith.mulf %0, %1 : vector<4x128xf32>
    %c0_1 = arith.constant 0 : index
    %c0_2 = arith.constant 0 : index
    %3 = vector.load %arg2[%c0_1, %c0_2] : memref<4x128xf32, #tpu.memory_space<vmem>>, vector<4x128xf32>
    tpu.vector_store %arg2[%c0_1, %c0_2], %2 {strides = array<i32>} : memref<4x128xf32, #tpu.memory_space<vmem>>, vector<4x128xf32>,
    return
  }
  func.func @transform_0(%arg0: i32) -> (i32, i32) {
    %c0_i32 = arith.constant 0 : i32
    %c0_i32_0 = arith.constant 0 : i32
    return %arg0, %c0_i32 : i32, i32
  }
  func.func @transform_1(%arg0: i32) -> (i32, i32) {
    %c0_i32 = arith.constant 0 : i32
    %c0_i32_0 = arith.constant 0 : i32
    return %arg0, %c0_i32 : i32, i32
  }
}

</mosaic_0001>

<llo_original>
// kernel: tpu_custom_call.1
$region0: #{tpu_custom_call.1}
  #allocation0 [shape = 'u32[]', space=smem, size = 0x4, offset = 0x4, fixed_abs, tag = 'smem constant byte address 0x4 - core index']
  #allocation1 [shape = 'u32[144,128]{1,0:T(1,128)}', space=vmem, size = 0x12000, scoped, tag = 'internal scratch']
  %s0 = inlined_call_operand.hbm [shape: f32[4,128], index: 0, kind: input, shape index: {}]
  %s1 = inlined_call_operand.hbm [shape: f32[4,128], index: 1, kind: output, shape index: {}]
  %s2 = sld [smem:[#allocation0]]
  $region18: #{tpu_custom_call.1} parent=0
    _
  %s4 = ssub.s32 1, %s2
  %s5 = scalar_select 0, %s4, %s2
  $region1: #{tpu_custom_call.1} parent=0
    #allocation2 [shape = 'u8[2048]{0}', space=vmem, size = 0x800, scoped, tag = 'input window, operand 0, single buffered']
    #allocation3 [shape = 's32[1]{0}', space=sflag, size = 0x4, scoped, tag = 'scoped memory for tpu_custom_call.1']
    #allocation4 [shape = 's32[1]{0}', space=sflag, size = 0x4, scoped, tag = 'scoped memory for tpu_custom_call.1']
    #allocation5 [shape = 'u8[2048]{0}', space=vmem, size = 0x800, scoped, tag = 'output window, operand 0, single buffered']
    %6 = vsyncpa [#allocation3], 0
    %7 = vsyncpa [#allocation4], 0
    // Predicated region
    $region2: #{tpu_custom_call.1} parent=1 // pred_check
      _
    $region3: #{tpu_custom_call.1} parent=1 // pred_check_branch
      %9 = sbr.rel (0) target = $region5
    $region4: #{tpu_custom_call.1} parent=1 // pred_region
      %s11 = ssub.s32 64, 64
      %12 = vsyncadd [#allocation3], %s11
      %s14 = sshll.u32 [#allocation2], 4
      %s15 = int_to_ptr.vmem [resolvable:$true] %s14
      %17 = dma.hbm_to_vmem [thread:$0]  %s0, 64, %s15, [#allocation3]
    $region5: #{tpu_custom_call.1} parent=1 // pred_fallthru
      _
    // Predicated region
    $region6: #{tpu_custom_call.1} parent=1 // pred_check
      _
    $region7: #{tpu_custom_call.1} parent=1 // pred_check_branch
      %19 = sbr.rel (0) target = $region9
    $region8: #{tpu_custom_call.1} parent=1 // pred_region
      %20 = dma.done [#allocation3], 64
    $region9: #{tpu_custom_call.1} parent=1 // pred_fallthru
      _
    %v21 = vld [vmem:[#allocation2] sm:$0xf]
    %v22 = vmul.f32 %v21, 5.656854
    %23 = vst [vmem:[#allocation5] sm:$0xf] %v22
    // Predicated region
    $region10: #{tpu_custom_call.1} parent=1 // pred_check
      _
    $region11: #{tpu_custom_call.1} parent=1 // pred_check_branch
      %25 = sbr.rel (0) target = $region13
    $region12: #{tpu_custom_call.1} parent=1 // pred_region
      %s27 = ssub.s32 64, 64
      %28 = vsyncadd [#allocation4], %s27
      %s30 = sshll.u32 [#allocation5], 4
      %s31 = int_to_ptr.vmem [resolvable:$true] %s30
      %33 = dma.vmem_to_hbm [thread:$0]  %s31, 64, %s1, [#allocation4]
    $region13: #{tpu_custom_call.1} parent=1 // pred_fallthru
      _
    // Predicated region
    $region14: #{tpu_custom_call.1} parent=1 // pred_check
      _
    $region15: #{tpu_custom_call.1} parent=1 // pred_check_branch
      %35 = sbr.rel (0) target = $region17
    $region16: #{tpu_custom_call.1} parent=1 // pred_region
      %36 = dma.done [#allocation4], 64
    $region17: #{tpu_custom_call.1} parent=1 // pred_fallthru
      _
    %37 = vsyncpa [#allocation3], 1
    %38 = vsyncpa [#allocation4], 1

</llo_original>
